<compile_context>
chip_gen: v6e
topology: v6e:2x2x1
jax: 0.10.0
libtpu: 0.0.40
codegen_flags: <defaults>
</compile_context>

<pallas_src>
import jax
import jax.numpy as jnp
from jax.experimental import pallas as pl
from jax.experimental.pallas import tpu as pltpu


def _gated_conv1x1_kernel(x_ref, w_ref, o_ref):
    # x_ref: (1, C_in, THW)   channels on sublanes, spatial on lanes
    # w_ref: (1, C_out, C_in) gate-folded 1x1 conv weight for this batch elem
    # o_ref: (1, C_out, THW)  lane-dense output tile
    o_ref[0] = jnp.dot(
        w_ref[0], x_ref[0], preferred_element_type=jnp.float32
    ).astype(o_ref.dtype)


def _round_up(v, m):
    return ((v + m - 1) // m) * m


def _num_tensorcores():
    """2 on v7x (2 TCs/chip share the grid via 'parallel' axes), else 1."""
    try:
        kind = jax.devices()[0].device_kind.lower()
    except Exception:
        return 1
    return 2 if "v7" in kind else 1


def sigmoid_mul_conv1x1(x_nchw, gate_nc11, weight_oihw, *, thw=None):
    """Conv2d_1x1(x * sigmoid(gate)), NCHW in / NCHW out.

    x_nchw:      (N, C_in, H, W)
    gate_nc11:   (N, C_in, 1, 1)
    weight_oihw: (C_out, C_in, 1, 1)
    Returns:     (N, C_out, H, W) with the dtype of x_nchw.
    """
    N, C_in, H, W = x_nchw.shape
    C_out = weight_oihw.shape[0]
    HW = H * W
    out_dtype = x_nchw.dtype

    # NCHW-native: plain reshapes only.
    x_rows = x_nchw.reshape(N, C_in, HW)

    # Fold sigmoid(gate) into the 1x1 weight once per batch element (tiny
    # (N, C_out, C_in) tensor) so the kernel body is a bare matmul.
    gate = jax.nn.sigmoid(gate_nc11.astype(jnp.float32).reshape(N, 1, C_in))
    w = weight_oihw.reshape(1, C_out, C_in).astype(jnp.float32)
    w_eff = (w * gate).astype(x_rows.dtype)                  # (N, C_out, C_in)

    itemsize = jnp.dtype(x_rows.dtype).itemsize
    vmem_budget = 24 * 1024 * 1024  # headroom under the 32 MiB scoped limit

    def _fits(t):
        # Double-buffered per-step working set: x tile + out tile + weight.
        per_step = 2 * (C_in * t * itemsize
                        + C_out * t * itemsize
                        + C_out * C_in * itemsize)
        return per_step <= vmem_budget

    if thw is None:
        n_cores = _num_tensorcores()
        # Only split spatially when the batch axis alone can't feed every TC.
        n_tiles = n_cores if (n_cores > 1 and N < n_cores) else 1
        if n_tiles > 1 and HW >= 128 * n_tiles:
            # Exactly n_tiles ceil-rounded, 128-lane-aligned tiles (no sliver
            # third tile, balanced across the two v7x TensorCores).
            thw = max(128, _round_up(pl.cdiv(HW, n_tiles), 128))
        else:
            # Single-TC chips (v5e/v6e) or tiny HW: one full-HW tile.
            thw = HW
    else:
        # Guard user-supplied tiles: lane-align and keep >= 512 lanes (small
        # tiles -> short strided-DMA segments + many grid steps).
        thw = min(HW, max(_round_up(thw, 128), min(512, HW)))

    # VMEM guard: shrink (128-aligned) until the working set fits, but never
    # below the ~512-lane DMA-efficiency knee.
    while not _fits(thw) and thw > 512:
        thw = max(512, _round_up(pl.cdiv(thw, 2), 128))

    grid = (N, pl.cdiv(HW, thw))  # partial last spatial tile is write-masked

    out_rows = pl.pallas_call(
        _gated_conv1x1_kernel,
        out_shape=jax.ShapeDtypeStruct((N, C_out, HW), out_dtype),
        grid_spec=pltpu.PrefetchScalarGridSpec(
            num_scalar_prefetch=0,
            grid=grid,
            in_specs=[
                pl.BlockSpec((1, C_in, thw), lambda n, i: (n, 0, i)),
                pl.BlockSpec((1, C_out, C_in), lambda n, i: (n, 0, 0)),
            ],
            out_specs=pl.BlockSpec((1, C_out, thw), lambda n, i: (n, 0, i)),
        ),
        compiler_params=pltpu.CompilerParams(
            dimension_semantics=("parallel", "parallel"),
            vmem_limit_bytes=32 * 1024 * 1024,
        ),
    )(x_rows, w_eff)

    return out_rows.reshape(N, C_out, H, W)


def _reference(x, gate, weight):
    gated = x * jax.nn.sigmoid(gate)
    return jnp.einsum(
        "nchw,oc->nohw", gated, weight.reshape(weight.shape[0], weight.shape[1])
    )


if __name__ == "__main__":
    # 1x1 conv 240 -> 40 channels as in the module, reduced spatial extents.
    C_in, C_out = 240, 40

    key = jax.random.PRNGKey(0)
    k_x, k_g, k_w, k_x2, k_g2, k_x3 = jax.random.split(key, 6)
    weight = jax.random.normal(k_w, (C_out, C_in, 1, 1), dtype=jnp.float32) * 0.05
    x80 = jax.random.normal(k_g, (1, C_in, 1, 1), dtype=jnp.float32)

    # --- Config 1: N=1, 16x16, auto tiling (single tile on v5e/v6e, 2x128 on
    #     v7x), f32 ---
    H = W = 16
    x76 = jax.random.normal(k_x, (1, C_in, H, W), dtype=jnp.float32)
    out = jax.block_until_ready(sigmoid_mul_conv1x1(x76, x80, weight))
    ref = _reference(x76, x80, weight)
    assert out.shape == (1, C_out, H, W)
    assert jnp.allclose(out, ref, atol=1e-4, rtol=1e-4)

    # --- Config 2: N=2, 20x20 (HW=400, not a multiple of 128) -> full-extent
    #     spatial block, batch axis feeds the cores ---
    N2, H2, W2 = 2, 20, 20
    x76b = jax.random.normal(k_x2, (N2, C_in, H2, W2), dtype=jnp.float32)
    gate2 = jax.random.normal(k_g2, (N2, C_in, 1, 1), dtype=jnp.float32)
    out2 = jax.block_until_ready(sigmoid_mul_conv1x1(x76b, gate2, weight))
    ref2 = _reference(x76b, gate2, weight)
    assert out2.shape == (N2, C_out, H2, W2)
    assert jnp.allclose(out2, ref2, atol=1e-4, rtol=1e-4)

    # --- Config 3: N=1, 36x36 (HW=1296), explicit thw=512 -> multi-step
    #     spatial grid with a write-masked partial last tile ---
    H3 = W3 = 36
    x76c = jax.random.normal(k_x3, (1, C_in, H3, W3), dtype=jnp.float32)
    out3 = jax.block_until_ready(sigmoid_mul_conv1x1(x76c, x80, weight, thw=512))
    ref3 = _reference(x76c, x80, weight)
    assert out3.shape == (1, C_out, H3, W3)
    assert jnp.allclose(out3, ref3, atol=1e-4, rtol=1e-4)

    print("KERNEL_OK")
</pallas_src>

<mosaic_0001>
module attributes {stable_mosaic.version = 11 : i64} {
  func.func @_gated_conv1x1_kernel(%arg0: i32, %arg1: i32, %arg2: memref<1x240x256xf32, #tpu.memory_space<vmem>>, %arg3: memref<1x40x240xf32, #tpu.memory_space<vmem>>, %arg4: memref<1x40x256xf32, #tpu.memory_space<vmem>>) attributes {dimension_semantics = [#tpu.dimension_semantics<parallel>, #tpu.dimension_semantics<parallel>], iteration_bounds = array<i64: 1, 1>, scalar_prefetch = 0 : i64, scratch_operands = 0 : i64, tpu.core_type = #tpu.core_type<tc>, window_params = [{transform_indices = @transform_0, window_bounds = array<i64: 1, 240, 256>}, {transform_indices = @transform_1, window_bounds = array<i64: 1, 40, 240>}, {transform_indices = @transform_2, window_bounds = array<i64: 1, 40, 256>}]} {
    %c0 = arith.constant 0 : index
    %c0_0 = arith.constant 0 : index
    %c0_1 = arith.constant 0 : index
    %0 = vector.load %arg3[%c0, %c0_0, %c0_1] : memref<1x40x240xf32, #tpu.memory_space<vmem>>, vector<1x40x240xf32>
    %1 = vector.shape_cast %0 : vector<1x40x240xf32> to vector<40x240xf32>
    %c0_2 = arith.constant 0 : index
    %c0_3 = arith.constant 0 : index
    %c0_4 = arith.constant 0 : index
    %2 = vector.load %arg2[%c0_2, %c0_3, %c0_4] : memref<1x240x256xf32, #tpu.memory_space<vmem>>, vector<1x240x256xf32>
    %3 = vector.shape_cast %2 : vector<1x240x256xf32> to vector<240x256xf32>
    %cst = arith.constant dense<0.000000e+00> : vector<40x256xf32>
    %4 = tpu.matmul %1, %3, %cst {dimension_numbers = #tpu.dot_dimension_numbers<[1], [0], [0], [1], [0, 0, 1, 1], [], []>} : vector<40x240xf32>, vector<240x256xf32>, vector<40x256xf32> -> vector<40x256xf32>
    %c0_5 = arith.constant 0 : index
    %c0_6 = arith.constant 0 : index
    %c0_7 = arith.constant 0 : index
    %5 = vector.load %arg4[%c0_5, %c0_6, %c0_7] : memref<1x40x256xf32, #tpu.memory_space<vmem>>, vector<1x40x256xf32>
    %6 = vector.shape_cast %5 : vector<1x40x256xf32> to vector<40x256xf32>
    %7 = vector.shape_cast %4 : vector<40x256xf32> to vector<1x40x256xf32>
    tpu.vector_store %arg4[%c0_5, %c0_6, %c0_7], %7 {strides = array<i32>} : memref<1x40x256xf32, #tpu.memory_space<vmem>>, vector<1x40x256xf32>,
    return
  }
  func.func @transform_0(%arg0: i32, %arg1: i32) -> (i32, i32, i32) {
    %c0_i32 = arith.constant 0 : i32
    %c0_i32_0 = arith.constant 0 : i32
    return %arg0, %c0_i32, %arg1 : i32, i32, i32
  }
  func.func @transform_1(%arg0: i32, %arg1: i32) -> (i32, i32, i32) {
    %c0_i32 = arith.constant 0 : i32
    %c0_i32_0 = arith.constant 0 : i32
    %c0_i32_1 = arith.constant 0 : i32
    return %arg0, %c0_i32, %c0_i32_0 : i32, i32, i32
  }
  func.func @transform_2(%arg0: i32, %arg1: i32) -> (i32, i32, i32) {
    %c0_i32 = arith.constant 0 : i32
    %c0_i32_0 = arith.constant 0 : i32
    return %arg0, %c0_i32, %arg1 : i32, i32, i32
  }
}

</mosaic_0001>

<llo_original>
// kernel: tpu_custom_call.1
$region0: #{tpu_custom_call.1}
  #allocation0 [shape = 'u32[]', space=smem, size = 0x4, offset = 0x4, fixed_abs, tag = 'smem constant byte address 0x4 - core index']
  #allocation1 [shape = 'u32[144,128]{1,0:T(1,128)}', space=vmem, size = 0x12000, scoped, tag = 'internal scratch']
  %s0 = inlined_call_operand.hbm [shape: f32[1,240,256], index: 0, kind: input, shape index: {}]
  %s1 = inlined_call_operand.hbm [shape: f32[1,40,240], index: 1, kind: input, shape index: {}]
  %s2 = inlined_call_operand.hbm [shape: f32[1,40,256], index: 2, kind: output, shape index: {}]
  %s3 = sld [smem:[#allocation0]]
  $region26: #{tpu_custom_call.1} parent=0
    _
  %s5 = ssub.s32 1, %s3
  %s6 = scalar_select 0, %s5, %s3
  $region1: #{tpu_custom_call.1} parent=0
    #allocation2 [shape = 'u8[245760]{0}', space=vmem, size = 0x3c000, scoped, tag = 'input window, operand 0, single buffered']
    #allocation3 [shape = 's32[1]{0}', space=sflag, size = 0x4, scoped, tag = 'scoped memory for tpu_custom_call.1']
    #allocation4 [shape = 's32[1]{0}', space=sflag, size = 0x4, scoped, tag = 'scoped memory for tpu_custom_call.1']
    #allocation5 [shape = 'u8[40960]{0}', space=vmem, size = 0xa000, scoped, tag = 'input window, operand 1, single buffered']
    #allocation6 [shape = 's32[1]{0}', space=sflag, size = 0x4, scoped, tag = 'scoped memory for tpu_custom_call.1']
    #allocation7 [shape = 'u8[40960]{0}', space=vmem, size = 0xa000, scoped, tag = 'output window, operand 0, single buffered']
    %7 = vsyncpa [#allocation3], 0
    %8 = vsyncpa [#allocation6], 0
    %9 = vsyncpa [#allocation4], 0
    // Predicated region
    $region2: #{tpu_custom_call.1} parent=1 // pred_check
      _
    $region3: #{tpu_custom_call.1} parent=1 // pred_check_branch
      %11 = sbr.rel (0) target = $region5
    $region4: #{tpu_custom_call.1} parent=1 // pred_region
      %s13 = ssub.s32 7680, 7680
      %14 = vsyncadd [#allocation3], %s13
      %s15 = sshll.u32 [#allocation2], 4
      %s16 = int_to_ptr.vmem [resolvable:$true] %s15
      %21 = dma.hbm_to_vmem [thread:$0]  %s0, 7680, %s16, [#allocation3], 256, 256, 16
    $region5: #{tpu_custom_call.1} parent=1 // pred_fallthru
      _
    // Predicated region
    $region6: #{tpu_custom_call.1} parent=1 // pred_check
      _
    $region7: #{tpu_custom_call.1} parent=1 // pred_check_branch
      %23 = sbr.rel (0) target = $region9
    $region8: #{tpu_custom_call.1} parent=1 // pred_region
      %s25 = ssub.s32 1280, 1280
      %26 = vsyncadd [#allocation6], %s25
      %s27 = sshll.u32 [#allocation5], 4
      %s28 = int_to_ptr.vmem [resolvable:$true] %s27
      %33 = dma.hbm_to_vmem [thread:$0]  %s1, 1280, %s28, [#allocation6], 256, 256, 16
    $region9: #{tpu_custom_call.1} parent=1 // pred_fallthru
      _
    // Predicated region
    $region10: #{tpu_custom_call.1} parent=1 // pred_check
      _
    $region11: #{tpu_custom_call.1} parent=1 // pred_check_branch
      %35 = sbr.rel (0) target = $region13
    $region12: #{tpu_custom_call.1} parent=1 // pred_region
      %36 = dma.done [#allocation3], 7680
    $region13: #{tpu_custom_call.1} parent=1 // pred_fallthru
      _
    // Predicated region
    $region14: #{tpu_custom_call.1} parent=1 // pred_check
      _
    $region15: #{tpu_custom_call.1} parent=1 // pred_check_branch
      %38 = sbr.rel (0) target = $region17
    $region16: #{tpu_custom_call.1} parent=1 // pred_region
      %39 = dma.done [#allocation6], 1280
    $region17: #{tpu_custom_call.1} parent=1 // pred_fallthru
      _
    %v40 = vld [vmem:[#allocation5] sm:$0xff]
    %v41 = vld [vmem:[#allocation5 + $0x8] sm:$0xff]
    %v42 = vld [vmem:[#allocation5 + $0x10] sm:$0xff]
    %v43 = vld [vmem:[#allocation5 + $0x18] sm:$0xff]
    %v44 = vld [vmem:[#allocation5 + $0x20] sm:$0xff]
    %v45 = vld [vmem:[#allocation5 + $0x28] sm:$0xff]
    %v46 = vld [vmem:[#allocation5 + $0x30] sm:$0xff]
    %v47 = vld [vmem:[#allocation5 + $0x38] sm:$0xff]
    %v48 = vld [vmem:[#allocation5 + $0x40] sm:$0xff]
    %v49 = vld [vmem:[#allocation5 + $0x48] sm:$0xff]
    %v50 = vld [vmem:[#allocation2] sm:$0xff]
    %v51 = vld [vmem:[#allocation2 + $0x8] sm:$0xff]
    %v52 = vld [vmem:[#allocation2 + $0x10] sm:$0xff]
    %v53 = vld [vmem:[#allocation2 + $0x18] sm:$0xff]
    %v54 = vld [vmem:[#allocation2 + $0x20] sm:$0xff]
    %v55 = vld [vmem:[#allocation2 + $0x28] sm:$0xff]
    %v56 = vld [vmem:[#allocation2 + $0x30] sm:$0xff]
    %v57 = vld [vmem:[#allocation2 + $0x38] sm:$0xff]
    %v58 = vld [vmem:[#allocation2 + $0x40] sm:$0xff]
    %v59 = vld [vmem:[#allocation2 + $0x48] sm:$0xff]
    %v60 = vld [vmem:[#allocation2 + $0x50] sm:$0xff]
    %v61 = vld [vmem:[#allocation2 + $0x58] sm:$0xff]
    %v62 = vld [vmem:[#allocation2 + $0x60] sm:$0xff]
    %v63 = vld [vmem:[#allocation2 + $0x68] sm:$0xff]
    %v64 = vld [vmem:[#allocation2 + $0x70] sm:$0xff]
    %v65 = vld [vmem:[#allocation2 + $0x78] sm:$0xff]
    %v66 = vld [vmem:[#allocation2 + $0x80] sm:$0xff]
    %v67 = vld [vmem:[#allocation2 + $0x88] sm:$0xff]
    %v68 = vld [vmem:[#allocation2 + $0x90] sm:$0xff]
    %v69 = vld [vmem:[#allocation2 + $0x98] sm:$0xff]
    %v70 = vld [vmem:[#allocation2 + $0xa0] sm:$0xff]
    %v71 = vld [vmem:[#allocation2 + $0xa8] sm:$0xff]
    %v72 = vld [vmem:[#allocation2 + $0xb0] sm:$0xff]
    %v73 = vld [vmem:[#allocation2 + $0xb8] sm:$0xff]
    %v74 = vld [vmem:[#allocation2 + $0xc0] sm:$0xff]
    %v75 = vld [vmem:[#allocation2 + $0xc8] sm:$0xff]
    %v76 = vld [vmem:[#allocation2 + $0xd0] sm:$0xff]
    %v77 = vld [vmem:[#allocation2 + $0xd8] sm:$0xff]
    %v78 = vld [vmem:[#allocation2 + $0xe0] sm:$0xff]
    %v79 = vld [vmem:[#allocation2 + $0xe8] sm:$0xff]
    %v80 = vld [vmem:[#allocation2 + $0xf0] sm:$0xff]
    %v81 = vld [vmem:[#allocation2 + $0xf8] sm:$0xff]
    %v82 = vld [vmem:[#allocation2 + $0x100] sm:$0xff]
    %v83 = vld [vmem:[#allocation2 + $0x108] sm:$0xff]
    %v84 = vld [vmem:[#allocation2 + $0x110] sm:$0xff]
    %v85 = vld [vmem:[#allocation2 + $0x118] sm:$0xff]
    %v86 = vld [vmem:[#allocation2 + $0x120] sm:$0xff]
    %v87 = vld [vmem:[#allocation2 + $0x128] sm:$0xff]
    %v88 = vld [vmem:[#allocation2 + $0x130] sm:$0xff]
    %v89 = vld [vmem:[#allocation2 + $0x138] sm:$0xff]
    %v90 = vld [vmem:[#allocation2 + $0x140] sm:$0xff]
    %v91 = vld [vmem:[#allocation2 + $0x148] sm:$0xff]
    %v92 = vld [vmem:[#allocation2 + $0x150] sm:$0xff]
    %v93 = vld [vmem:[#allocation2 + $0x158] sm:$0xff]
    %v94 = vld [vmem:[#allocation2 + $0x160] sm:$0xff]
    %v95 = vld [vmem:[#allocation2 + $0x168] sm:$0xff]
    %v96 = vld [vmem:[#allocation2 + $0x170] sm:$0xff]
    %v97 = vld [vmem:[#allocation2 + $0x178] sm:$0xff]
    %v98 = vld [vmem:[#allocation2 + $0x180] sm:$0xff]
    %v99 = vld [vmem:[#allocation2 + $0x188] sm:$0xff]
    %v100 = vld [vmem:[#allocation2 + $0x190] sm:$0xff]
    %v101 = vld [vmem:[#allocation2 + $0x198] sm:$0xff]
    %v102 = vld [vmem:[#allocation2 + $0x1a0] sm:$0xff]
    %v103 = vld [vmem:[#allocation2 + $0x1a8] sm:$0xff]
    %v104 = vld [vmem:[#allocation2 + $0x1b0] sm:$0xff]
    %v105 = vld [vmem:[#allocation2 + $0x1b8] sm:$0xff]
    %v106 = vld [vmem:[#allocation2 + $0x1c0] sm:$0xff]
    %v107 = vld [vmem:[#allocation2 + $0x1c8] sm:$0xff]
    %v108 = vld [vmem:[#allocation2 + $0x1d0] sm:$0xff]
    %v109 = vld [vmem:[#allocation2 + $0x1d8] sm:$0xff]
    %vm110 = vcmask 916480
    %v112 = vsel %vm110, %v41, 0
    %v115 = vsel %vm110, %v43, 0
    %v118 = vsel %vm110, %v45, 0
    %v121 = vsel %vm110, %v47, 0
    %v124 = vsel %vm110, %v49, 0
    %126 = vmatprep.subr.mxu0 %v81
    %127 = vmatpush1.msra.mxu0 %v80
    %128 = vmatprep.subr.mxu0 %v79
    %129 = vmatpush1.msra.mxu0 %v78
    %130 = vmatprep.subr.mxu0 %v77
    %131 = vmatpush1.msra.mxu0 %v76
    %132 = vmatprep.subr.mxu0 %v75
    %133 = vmatpush1.msra.mxu0 %v74
    %134 = vmatprep.subr.mxu0 %v73
    %135 = vmatpush1.msra.mxu0 %v72
    %136 = vmatprep.subr.mxu0 %v71
    %137 = vmatpush1.msra.mxu0 %v70
    %138 = vmatprep.subr.mxu0 %v69
    %139 = vmatpush1.msra.mxu0 %v68
    %140 = vmatprep.subr.mxu0 %v67
    %141 = vmatpush1.msra.mxu0 %v66
    %142 = vmatprep.subr.mxu0 %v65
    %143 = vmatpush1.msra.mxu0 %v64
    %144 = vmatprep.subr.mxu0 %v63
    %145 = vmatpush1.msra.mxu0 %v62
    %146 = vmatprep.subr.mxu0 %v61
    %147 = vmatpush1.msra.mxu0 %v60
    %148 = vmatprep.subr.mxu0 %v59
    %149 = vmatpush1.msra.mxu0 %v58
    %150 = vmatprep.subr.mxu0 %v57
    %151 = vmatpush1.msra.mxu0 %v56
    %152 = vmatprep.subr.mxu0 %v55
    %153 = vmatpush1.msra.mxu0 %v54
    %154 = vmatprep.subr.mxu0 %v53
    %155 = vmatpush1.msra.mxu0 %v52
    %156 = vmatprep.subr.mxu0 %v51
    %157 = vmatpush1.msra.mxu0 %v50
    %158 = vmatprep.subr.mxu0 0.0
    %159 = vmatpush2.msra.mxu0 0.0
    %160 = vmatprep.subr.mxu0 0.0
    %161 = vmatpush2.msra.mxu0 0.0
    %162 = vmatprep.subr.mxu0 %v109
    %163 = vmatpush2.msra.mxu0 %v108
    %164 = vmatprep.subr.mxu0 %v107
    %165 = vmatpush2.msra.mxu0 %v106
    %166 = vmatprep.subr.mxu0 %v105
    %167 = vmatpush2.msra.mxu0 %v104
    %168 = vmatprep.subr.mxu0 %v103
    %169 = vmatpush2.msra.mxu0 %v102
    %170 = vmatprep.subr.mxu0 %v101
    %171 = vmatpush2.msra.mxu0 %v100
    %172 = vmatprep.subr.mxu0 %v99
    %173 = vmatpush2.msra.mxu0 %v98
    %174 = vmatprep.subr.mxu0 %v97
    %175 = vmatpush2.msra.mxu0 %v96
    %176 = vmatprep.subr.mxu0 %v95
    %177 = vmatpush2.msra.mxu0 %v94
    %178 = vmatprep.subr.mxu0 %v93
    %179 = vmatpush2.msra.mxu0 %v92
    %180 = vmatprep.subr.mxu0 %v91
    %181 = vmatpush2.msra.mxu0 %v90
    %182 = vmatprep.subr.mxu0 %v89
    %183 = vmatpush2.msra.mxu0 %v88
    %184 = vmatprep.subr.mxu0 %v87
    %185 = vmatpush2.msra.mxu0 %v86
    %186 = vmatprep.subr.mxu0 %v85
    %187 = vmatpush2.msra.mxu0 %v84
    %188 = vmatprep.subr.mxu0 %v83
    %189 = vmatpush2.msra.mxu0 %v82
    %190 = vmatprep.mubr.f32.mxu0 %v112
    %191 = vmatmul.mubr.f32.gmra.mxu0 %v40
    %v192 = vpop.f32.mrf.mxu0
    %v193 = vadd.f32 0.0, %v192
    %v194 = vpop.f32.mrf.mxu0
    %v195 = vadd.f32 0.0, %v194
    %196 = vmatprep.mubr.f32.mxu0 %v115
    %197 = vmatmul.mubr.f32.gmra.mxu0 %v42
    %v198 = vpop.f32.mrf.mxu0
    %v199 = vadd.f32 0.0, %v198
    %v200 = vpop.f32.mrf.mxu0
    %v201 = vadd.f32 0.0, %v200
    %202 = vmatprep.mubr.f32.mxu0 %v118
    %203 = vmatmul.mubr.f32.gmra.mxu0 %v44
    %v204 = vpop.f32.mrf.mxu0
    %v205 = vadd.f32 0.0, %v204
    %v206 = vpop.f32.mrf.mxu0
    %v207 = vadd.f32 0.0, %v206
    %208 = vmatprep.mubr.f32.mxu0 %v121
    %209 = vmatmul.mubr.f32.gmra.mxu0 %v46
    %v210 = vpop.f32.mrf.mxu0
    %v211 = vadd.f32 0.0, %v210
    %v212 = vpop.f32.mrf.mxu0
    %v213 = vadd.f32 0.0, %v212
    %214 = vmatprep.mubr.f32.mxu0 %v124
    %215 = vmatmul.mubr.f32.gmra.mxu0 %v48
    %v216 = vpop.f32.mrf.mxu0
    %v217 = vadd.f32 0.0, %v216
    %v218 = vpop.f32.mrf.mxu0
    %v219 = vadd.f32 0.0, %v218
    %220 = vdwg.mxu0
    %221 = vst [vmem:[#allocation7] sm:$0xff] %v193
    %222 = vst [vmem:[#allocation7 + $0x8] sm:$0xff] %v195
    %223 = vst [vmem:[#allocation7 + $0x10] sm:$0xff] %v199
    %224 = vst [vmem:[#allocation7 + $0x18] sm:$0xff] %v201
    %225 = vst [vmem:[#allocation7 + $0x20] sm:$0xff] %v205
    %226 = vst [vmem:[#allocation7 + $0x28] sm:$0xff] %v207
    %227 = vst [vmem:[#allocation7 + $0x30] sm:$0xff] %v211
    %228 = vst [vmem:[#allocation7 + $0x38] sm:$0xff] %v213
    %229 = vst [vmem:[#allocation7 + $0x40] sm:$0xff] %v217
    %230 = vst [vmem:[#allocation7 + $0x48] sm:$0xff] %v219
    // Predicated region
    $region18: #{tpu_custom_call.1} parent=1 // pred_check
      _
    $region19: #{tpu_custom_call.1} parent=1 // pred_check_branch
      %232 = sbr.rel (0) target = $region21
    $region20: #{tpu_custom_call.1} parent=1 // pred_region
      %s234 = ssub.s32 1280, 1280
      %235 = vsyncadd [#allocation4], %s234
      %s236 = sshll.u32 [#allocation7], 4
      %s237 = int_to_ptr.vmem [resolvable:$true] %s236
      %242 = dma.vmem_to_hbm [thread:$0]  %s237, 1280, %s2, [#allocation4], 256, 256, 16
    $region21: #{tpu_custom_call.1} parent=1 // pred_fallthru
      _
    // Predicated region
    $region22: #{tpu_custom_call.1} parent=1 // pred_check
      _
    $region23: #{tpu_custom_call.1} parent=1 // pred_check_branch
      %244 = sbr.rel (0) target = $region25
    $region24: #{tpu_custom_call.1} parent=1 // pred_region
      %245 = dma.done [#allocation4], 1280
    $region25: #{tpu_custom_call.1} parent=1 // pred_fallthru
      _
    %246 = vsyncpa [#allocation3], 1
    %247 = vsyncpa [#allocation6], 1
    %248 = vsyncpa [#allocation4], 1

</llo_original>
